<compile_context>
chip_gen: v6e
topology: v6e:2x2x1
jax: 0.10.0
libtpu: 0.0.40
codegen_flags: <defaults>
</compile_context>

<pallas_src>
import math
from functools import partial

import jax
import jax.numpy as jnp
from jax.experimental import pallas as pl
from jax.experimental.pallas import tpu as pltpu

_VMEM_LIMIT = 48 * 1024 * 1024  # safe on v5e/v6e (128 MiB) and v7x (64 MiB per TC)


# --------------------------------------------------------------------------- #
# Fused Q/K/V projection (bf16 operands, f32 accumulation)
# --------------------------------------------------------------------------- #
def _qkv_shared_kernel(x_ref, w_ref, b_ref, q_ref, k_ref, v_ref):
    """Self-attention fast path: one (tm, D) @ (D, 3D) bf16 matmul, 3 lane-dense outs."""
    d = q_ref.shape[-1]
    x = x_ref[...].astype(jnp.bfloat16)
    y = jnp.dot(x, w_ref[...], preferred_element_type=jnp.float32)
    y = y + b_ref[...]
    q_ref[...] = y[:, :d].astype(q_ref.dtype)
    k_ref[...] = y[:, d:2 * d].astype(k_ref.dtype)
    v_ref[...] = y[:, 2 * d:].astype(v_ref.dtype)


def _qkv_distinct_kernel(xq_ref, xk_ref, xv_ref, w_ref, b_ref, q_ref, k_ref, v_ref):
    """General path (distinct q/k/v inputs): 3 bf16 matmuls, one launch, one resident weight."""
    d = q_ref.shape[-1]

    def proj(x_ref, lo):
        x = x_ref[...].astype(jnp.bfloat16)
        y = jnp.dot(x, w_ref[:, lo:lo + d], preferred_element_type=jnp.float32)
        return (y + b_ref[:, lo:lo + d]).astype(q_ref.dtype)

    q_ref[...] = proj(xq_ref, 0)
    k_ref[...] = proj(xk_ref, d)
    v_ref[...] = proj(xv_ref, 2 * d)


def fused_qkv_projection(xq, xk, xv, w_qkv, b_qkv, *, block_rows=256):
    """xq/xk/xv: (N, D) f32; w_qkv: (D, 3D) bf16 (scale pre-folded into q columns);
    returns (q, k, v) each (N, D) bf16."""
    N, D = xq.shape
    tm = min(block_rows, N)                      # tm is a multiple of 8 or == N
    grid = (pl.cdiv(N, tm),)
    shared = (xq is xk) and (xk is xv)
    b2 = b_qkv.reshape(1, 3 * D)
    row_spec = pl.BlockSpec((tm, D), lambda i: (i, 0))
    # Weight / bias index maps are constant -> re-DMA is skipped across grid steps.
    # TODO(synk): add pipeline_mode=pl.Buffered(1) to these constant specs once
    # single-buffered pipeline_mode is verified on the deployed jax version.
    w_spec = pl.BlockSpec((D, 3 * D), lambda i: (0, 0))
    b_spec = pl.BlockSpec((1, 3 * D), lambda i: (0, 0))
    out_shape = tuple(jax.ShapeDtypeStruct((N, D), jnp.bfloat16) for _ in range(3))
    out_specs = tuple(pl.BlockSpec((tm, D), lambda i: (i, 0)) for _ in range(3))
    params = pltpu.CompilerParams(dimension_semantics=("parallel",),
                                  vmem_limit_bytes=_VMEM_LIMIT)
    # TODO(synk): for very large d_model (>= ~2K, esp. v7x 64 MiB VMEM) the resident
    # (D, 3D) weight should be K/N-tiled with an "arbitrary" reduction axis.
    n_in = 1 if shared else 3
    cost = pl.CostEstimate(
        flops=6 * N * D * D,
        transcendentals=0,
        bytes_accessed=n_in * N * D * 4 + D * 3 * D * 2 + 3 * D * 4 + 3 * N * D * 2,
    )

    if shared:                                   # self-attention: read x once
        return pl.pallas_call(
            _qkv_shared_kernel,
            out_shape=out_shape,
            grid=grid,
            in_specs=[row_spec, w_spec, b_spec],
            out_specs=out_specs,
            compiler_params=params,
            cost_estimate=cost,
        )(xq, w_qkv, b2)

    return pl.pallas_call(
        _qkv_distinct_kernel,
        out_shape=out_shape,
        grid=grid,
        in_specs=[row_spec, row_spec, row_spec, w_spec, b_spec],
        out_specs=out_specs,
        compiler_params=params,
        cost_estimate=cost,
    )(xq, xk, xv, w_qkv, b2)


# --------------------------------------------------------------------------- #
# Output projection (row-tiled linear, bf16 operands, f32 accumulation)
# --------------------------------------------------------------------------- #
def _linear_kernel(x_ref, w_ref, b_ref, o_ref):
    x = x_ref[...].astype(jnp.bfloat16)
    y = jnp.dot(x, w_ref[...], preferred_element_type=jnp.float32)
    o_ref[...] = (y + b_ref[...]).astype(o_ref.dtype)


def pallas_linear(x, w, b, *, block_rows=256, out_dtype=jnp.float32):
    """y = x @ w + b with w stored (d_in, d_out) bf16; row-tiled + pipelined."""
    N, d_in = x.shape
    d_out = w.shape[1]
    tm = min(block_rows, N)
    cost = pl.CostEstimate(
        flops=2 * N * d_in * d_out,
        transcendentals=0,
        bytes_accessed=N * d_in * x.dtype.itemsize + d_in * d_out * 2
        + N * d_out * 4 + d_out * 4,
    )
    return pl.pallas_call(
        _linear_kernel,
        out_shape=jax.ShapeDtypeStruct((N, d_out), out_dtype),
        grid=(pl.cdiv(N, tm),),
        in_specs=[pl.BlockSpec((tm, d_in), lambda i: (i, 0)),
                  pl.BlockSpec((d_in, d_out), lambda i: (0, 0)),
                  pl.BlockSpec((1, d_out), lambda i: (0, 0))],
        out_specs=pl.BlockSpec((tm, d_out), lambda i: (i, 0)),
        compiler_params=pltpu.CompilerParams(dimension_semantics=("parallel",),
                                             vmem_limit_bytes=_VMEM_LIMIT),
        cost_estimate=cost,
    )(x, w, b.reshape(1, d_out))


# --------------------------------------------------------------------------- #
# Flash (online-softmax) multi-head attention, heads split inside the kernel
# --------------------------------------------------------------------------- #
def _flash_mha_kernel(q_ref, k_ref, v_ref, o_ref, m_sc, l_sc, acc_sc, *, h):
    ki = pl.program_id(2)

    @pl.when(ki == 0)
    def _():
        m_sc[...] = jnp.full_like(m_sc, -jnp.inf)
        l_sc[...] = jnp.zeros_like(l_sc)
        acc_sc[...] = jnp.zeros_like(acc_sc)

    d_model = o_ref.shape[-1]
    d_k = d_model // h
    q = q_ref[0]                                  # (tq, D) bf16, lane-dense load
    k = k_ref[0]                                  # (tkv, D) bf16
    v = v_ref[0]                                  # (tkv, D) bf16

    # Static unroll over heads; per-head state lives in VMEM scratch and each
    # head's accumulation is written straight into its lane slice, so no values
    # survive across head iterations.
    # TODO(synk): for large h with d_k==64, process heads in aligned 128-lane
    # pairs (or a fori_loop over lane-aligned slices) to bound live ranges and
    # avoid odd-head lane shuffles.
    for hd in range(h):
        lo = hd * d_k
        qh = q[:, lo:lo + d_k]                    # scale already folded into W_q
        kh = k[:, lo:lo + d_k]
        vh = v[:, lo:lo + d_k]

        # scores (tq, tkv): contract on d_k of both operands (no explicit k.T)
        s = jax.lax.dot_general(qh, kh, (((1,), (1,)), ((), ())),
                                preferred_element_type=jnp.float32)

        m_prev = m_sc[:, hd:hd + 1]               # (tq, 1)
        m_new = jnp.maximum(m_prev, jnp.max(s, axis=-1, keepdims=True))
        alpha = jnp.exp(m_prev - m_new)           # rescale of old running stats
        p = jnp.exp(s - m_new)                    # (tq, tkv) f32
        # denominator replicated across this head's d_k lanes -> trivial epilogue
        l_sc[:, lo:lo + d_k] = (alpha * l_sc[:, lo:lo + d_k]
                                + jnp.sum(p, axis=-1, keepdims=True))
        pv = jnp.dot(p.astype(vh.dtype), vh, preferred_element_type=jnp.float32)
        acc_sc[:, lo:lo + d_k] = alpha * acc_sc[:, lo:lo + d_k] + pv
        m_sc[:, hd:hd + 1] = m_new

    @pl.when(ki == pl.num_programs(2) - 1)
    def _():
        l = l_sc[...]                             # (tq, D)
        r = pl.reciprocal(l, approx=True)         # EUP slot (nearly free)
        r = r * (2.0 - l * r)                     # one Newton step -> ~f32 exact
        # single unmasked lane-dense (tq, D) store; heads already concatenated
        o_ref[0] = (acc_sc[...] * r).astype(o_ref.dtype)


def _divisor_tile(n, pref):
    """Largest power-of-two tile <= pref dividing n (falls back to whole axis)."""
    if n <= pref:
        return n
    t = pref
    while t > 8 and n % t:
        t //= 2
    return t if n % t == 0 else n
    # TODO(synk): mask ragged kv tails instead of requiring divisibility.


def flash_mha(q, k, v, h, *, tq_pref=256, tkv_pref=256):
    """q: (B, Sq, D), k/v: (B, Skv, D) bf16 in concat-head layout -> (B, Sq, D) bf16."""
    B, Sq, D = q.shape
    Skv = k.shape[1]
    tq = _divisor_tile(Sq, tq_pref)               # 256-aligned when possible (v6e/v7x MXU)
    tkv = _divisor_tile(Skv, tkv_pref)
    # TODO(synk): on v5e prefer tq/tkv=128 (16 MiB scoped VMEM, 128-deep MXU); on
    # v7x shrink tq for B*(Sq/tq) < 2 so both TensorCores get work.

    q_spec = pl.BlockSpec((1, tq, D), lambda b, qi, ki: (b, qi, 0))
    kv_spec = pl.BlockSpec((1, tkv, D), lambda b, qi, ki: (b, ki, 0))
    cost = pl.CostEstimate(
        flops=4 * B * Sq * Skv * D,
        transcendentals=B * h * Sq * Skv,
        bytes_accessed=2 * (B * Sq * D + 2 * B * Skv * D + B * Sq * D),
    )

    return pl.pallas_call(
        partial(_flash_mha_kernel, h=h),
        out_shape=jax.ShapeDtypeStruct((B, Sq, D), q.dtype),
        grid=(B, Sq // tq, Skv // tkv),
        in_specs=[q_spec, kv_spec, kv_spec],
        out_specs=pl.BlockSpec((1, tq, D), lambda b, qi, ki: (b, qi, 0)),
        scratch_shapes=[
            pltpu.VMEM((tq, h), jnp.float32),       # running max (compact)
            pltpu.VMEM((tq, D), jnp.float32),       # running denom (replicated per head)
            pltpu.VMEM((tq, D), jnp.float32),       # running numerator (lane-dense)
        ],
        compiler_params=pltpu.CompilerParams(
            dimension_semantics=("parallel", "parallel", "arbitrary"),
            vmem_limit_bytes=_VMEM_LIMIT),
        cost_estimate=cost,
    )(q, k, v)


# --------------------------------------------------------------------------- #
# Module equivalent
# --------------------------------------------------------------------------- #
class MultiHeadedAttention:
    def __init__(self, h, d_model, key, dropout=0.1):
        assert d_model % h == 0
        self.h = h
        self.d_k = d_model // h
        self.d_model = d_model
        self.dropout = dropout  # TODO(synk): dropout (p=0.1) is identity in eval mode; not applied.
        # 4 Linear(d_model, d_model) layers, PyTorch default init
        # U(-1/sqrt(fan_in), 1/sqrt(fan_in)); weights stored transposed (d_in, d_out).
        bound = 1.0 / math.sqrt(d_model)
        keys = jax.random.split(key, 8)
        self.weights, self.biases = [], []
        for i in range(4):
            self.weights.append(jax.random.uniform(
                keys[2 * i], (d_model, d_model), jnp.float32, -bound, bound))
            self.biases.append(jax.random.uniform(
                keys[2 * i + 1], (d_model,), jnp.float32, -bound, bound))

        # Kernel-side parameters:
        #  * 1/sqrt(d_k) folded into the q-projection weight/bias (free at runtime)
        #  * weights stored bf16 for MXU peak + halved VMEM/HBM traffic; biases f32.
        scale = 1.0 / math.sqrt(self.d_k)
        self.w_qkv = jnp.concatenate(
            [self.weights[0] * scale, self.weights[1], self.weights[2]],
            axis=1).astype(jnp.bfloat16)
        self.b_qkv = jnp.concatenate(
            [self.biases[0] * scale, self.biases[1], self.biases[2]]).astype(jnp.float32)
        self.w_out = self.weights[3].astype(jnp.bfloat16)
        self.b_out = self.biases[3]

    def __call__(self, query, key, value, mask=None):
        # TODO(synk): attention-mask broadcasting path not implemented (mask=None only).
        assert mask is None
        B, Sq, D = query.shape
        Skv = key.shape[1]

        shared = (query is key) and (key is value)
        xq = query.reshape(B * Sq, D)
        xk = xq if shared else key.reshape(B * Skv, D)
        xv = xq if shared else value.reshape(B * Skv, D)

        q, k, v = fused_qkv_projection(xq, xk, xv, self.w_qkv, self.b_qkv)

        # (B*S, D) <-> (B, S, D) reshapes are free (row-major, no data movement);
        # heads are split inside the flash kernel -> no host (B,H,S,d_k) transposes.
        x = flash_mha(q.reshape(B, Sq, D), k.reshape(B, Skv, D),
                      v.reshape(B, Skv, D), self.h)

        out = pallas_linear(x.reshape(B * Sq, D), self.w_out, self.b_out)
        return out.reshape(B, Sq, D)


# --------------------------------------------------------------------------- #
# Pure-JAX reference (f32 weights, vanilla softmax attention)
# --------------------------------------------------------------------------- #
def reference_mha(mha, q_in, k_in, v_in):
    B = q_in.shape[0]
    H, d_k = mha.h, mha.d_k

    def lin(x, w, b):
        return x @ w + b

    def proj(x, w, b):
        S = x.shape[1]
        return lin(x, w, b).reshape(B, S, H, d_k).transpose(0, 2, 1, 3)

    q = proj(q_in, mha.weights[0], mha.biases[0])
    k = proj(k_in, mha.weights[1], mha.biases[1])
    v = proj(v_in, mha.weights[2], mha.biases[2])
    scores = jnp.einsum("bhqd,bhkd->bhqk", q, k) / math.sqrt(d_k)
    p = jax.nn.softmax(scores, axis=-1)
    x = jnp.einsum("bhqk,bhkd->bhqd", p, v)
    x = x.transpose(0, 2, 1, 3).reshape(B, q_in.shape[1], H * d_k)
    return lin(x, mha.weights[3], mha.biases[3])


if __name__ == "__main__":
    B, S, d_model, H = 2, 8, 32, 4
    root = jax.random.PRNGKey(0)
    k_param, k_q, k_k, k_v = jax.random.split(root, 4)

    mha = MultiHeadedAttention(H, d_model, k_param)

    query = jax.random.normal(k_q, (B, S, d_model), jnp.float32)
    key = jax.random.normal(k_k, (B, S, d_model), jnp.float32)
    value = jax.random.normal(k_v, (B, S, d_model), jnp.float32)

    # bf16-operand pipeline -> compare against f32 reference with loosened tolerance.
    ATOL = RTOL = 5e-2

    # Cross-attention style call (distinct q/k/v): exercises the 3-input fused projection.
    out = jax.block_until_ready(mha(query, key, value))
    ref = reference_mha(mha, query, key, value)
    assert out.shape == (B, S, d_model)
    assert jnp.allclose(out, ref, atol=ATOL, rtol=RTOL), \
        float(jnp.max(jnp.abs(out - ref)))

    # Self-attention call (q is k is v): exercises the shared-input single-matmul QKV path.
    out_sa = jax.block_until_ready(mha(query, query, query))
    ref_sa = reference_mha(mha, query, query, query)
    assert jnp.allclose(out_sa, ref_sa, atol=ATOL, rtol=RTOL), \
        float(jnp.max(jnp.abs(out_sa - ref_sa)))

    print("KERNEL_OK")
</pallas_src>

<mosaic_0001>
module attributes {stable_mosaic.version = 11 : i64} {
  func.func @_qkv_distinct_kernel(%arg0: i32, %arg1: memref<16x32xf32, #tpu.memory_space<vmem>>, %arg2: memref<16x32xf32, #tpu.memory_space<vmem>>, %arg3: memref<16x32xf32, #tpu.memory_space<vmem>>, %arg4: memref<32x96xbf16, #tpu.memory_space<vmem>>, %arg5: memref<1x96xf32, #tpu.memory_space<vmem>>, %arg6: memref<16x32xbf16, #tpu.memory_space<vmem>>, %arg7: memref<16x32xbf16, #tpu.memory_space<vmem>>, %arg8: memref<16x32xbf16, #tpu.memory_space<vmem>>) attributes {dimension_semantics = [#tpu.dimension_semantics<parallel>], iteration_bounds = array<i64: 1>, scalar_prefetch = 0 : i64, scratch_operands = 0 : i64, tpu.core_type = #tpu.core_type<tc>, window_params = [{transform_indices = @transform_0, window_bounds = array<i64: 16, 32>}, {transform_indices = @transform_1, window_bounds = array<i64: 16, 32>}, {transform_indices = @transform_2, window_bounds = array<i64: 16, 32>}, {pipeline_mode = #tpu.pipeline_mode<synchronous>, transform_indices = @transform_3, window_bounds = array<i64: 32, 96>}, {pipeline_mode = #tpu.pipeline_mode<synchronous>, transform_indices = @transform_4, window_bounds = array<i64: 1, 96>}, {transform_indices = @transform_5, window_bounds = array<i64: 16, 32>}, {transform_indices = @transform_6, window_bounds = array<i64: 16, 32>}, {transform_indices = @transform_7, window_bounds = array<i64: 16, 32>}]} {
    %c0 = arith.constant 0 : index
    %c0_0 = arith.constant 0 : index
    %0 = vector.load %arg1[%c0, %c0_0] : memref<16x32xf32, #tpu.memory_space<vmem>>, vector<16x32xf32>
    %1 = arith.truncf %0 : vector<16x32xf32> to vector<16x32xbf16>
    %c0_1 = arith.constant 0 : index
    %c0_2 = arith.constant 0 : index
    %2 = vector.load %arg4[%c0_1, %c0_2] : memref<32x96xbf16, #tpu.memory_space<vmem>>, vector<32x32xbf16>
    %cst = arith.constant dense<0.000000e+00> : vector<16x32xf32>
    %3 = tpu.matmul %1, %2, %cst {dimension_numbers = #tpu.dot_dimension_numbers<[1], [0], [0], [1], [0, 0, 1, 1], [], []>} : vector<16x32xbf16>, vector<32x32xbf16>, vector<16x32xf32> -> vector<16x32xf32>
    %c0_3 = arith.constant 0 : index
    %c0_4 = arith.constant 0 : index
    %4 = vector.load %arg5[%c0_3, %c0_4] : memref<1x96xf32, #tpu.memory_space<vmem>>, vector<1x32xf32>
    %5 = vector.broadcast %4 : vector<1x32xf32> to vector<16x32xf32>
    %6 = arith.addf %3, %5 : vector<16x32xf32>
    %7 = arith.truncf %6 : vector<16x32xf32> to vector<16x32xbf16>
    %c0_5 = arith.constant 0 : index
    %c0_6 = arith.constant 0 : index
    %8 = vector.load %arg6[%c0_5, %c0_6] : memref<16x32xbf16, #tpu.memory_space<vmem>>, vector<16x32xbf16>
    tpu.vector_store %arg6[%c0_5, %c0_6], %7 {strides = array<i32>} : memref<16x32xbf16, #tpu.memory_space<vmem>>, vector<16x32xbf16>,
    %c0_7 = arith.constant 0 : index
    %c0_8 = arith.constant 0 : index
    %9 = vector.load %arg2[%c0_7, %c0_8] : memref<16x32xf32, #tpu.memory_space<vmem>>, vector<16x32xf32>
    %10 = arith.truncf %9 : vector<16x32xf32> to vector<16x32xbf16>
    %c0_9 = arith.constant 0 : index
    %c32 = arith.constant 32 : index
    %11 = vector.load %arg4[%c0_9, %c32] : memref<32x96xbf16, #tpu.memory_space<vmem>>, vector<32x32xbf16>
    %cst_10 = arith.constant dense<0.000000e+00> : vector<16x32xf32>
    %12 = tpu.matmul %10, %11, %cst_10 {dimension_numbers = #tpu.dot_dimension_numbers<[1], [0], [0], [1], [0, 0, 1, 1], [], []>} : vector<16x32xbf16>, vector<32x32xbf16>, vector<16x32xf32> -> vector<16x32xf32>
    %c0_11 = arith.constant 0 : index
    %c32_12 = arith.constant 32 : index
    %13 = vector.load %arg5[%c0_11, %c32_12] : memref<1x96xf32, #tpu.memory_space<vmem>>, vector<1x32xf32>
    %14 = vector.broadcast %13 : vector<1x32xf32> to vector<16x32xf32>
    %15 = arith.addf %12, %14 : vector<16x32xf32>
    %16 = arith.truncf %15 : vector<16x32xf32> to vector<16x32xbf16>
    %c0_13 = arith.constant 0 : index
    %c0_14 = arith.constant 0 : index
    %17 = vector.load %arg7[%c0_13, %c0_14] : memref<16x32xbf16, #tpu.memory_space<vmem>>, vector<16x32xbf16>
    tpu.vector_store %arg7[%c0_13, %c0_14], %16 {strides = array<i32>} : memref<16x32xbf16, #tpu.memory_space<vmem>>, vector<16x32xbf16>,
    %c0_15 = arith.constant 0 : index
    %c0_16 = arith.constant 0 : index
    %18 = vector.load %arg3[%c0_15, %c0_16] : memref<16x32xf32, #tpu.memory_space<vmem>>, vector<16x32xf32>
    %19 = arith.truncf %18 : vector<16x32xf32> to vector<16x32xbf16>
    %c0_17 = arith.constant 0 : index
    %c64 = arith.constant 64 : index
    %20 = vector.load %arg4[%c0_17, %c64] : memref<32x96xbf16, #tpu.memory_space<vmem>>, vector<32x32xbf16>
    %cst_18 = arith.constant dense<0.000000e+00> : vector<16x32xf32>
    %21 = tpu.matmul %19, %20, %cst_18 {dimension_numbers = #tpu.dot_dimension_numbers<[1], [0], [0], [1], [0, 0, 1, 1], [], []>} : vector<16x32xbf16>, vector<32x32xbf16>, vector<16x32xf32> -> vector<16x32xf32>
    %c0_19 = arith.constant 0 : index
    %c64_20 = arith.constant 64 : index
    %22 = vector.load %arg5[%c0_19, %c64_20] : memref<1x96xf32, #tpu.memory_space<vmem>>, vector<1x32xf32>
    %23 = vector.broadcast %22 : vector<1x32xf32> to vector<16x32xf32>
    %24 = arith.addf %21, %23 : vector<16x32xf32>
    %25 = arith.truncf %24 : vector<16x32xf32> to vector<16x32xbf16>
    %c0_21 = arith.constant 0 : index
    %c0_22 = arith.constant 0 : index
    %26 = vector.load %arg8[%c0_21, %c0_22] : memref<16x32xbf16, #tpu.memory_space<vmem>>, vector<16x32xbf16>
    tpu.vector_store %arg8[%c0_21, %c0_22], %25 {strides = array<i32>} : memref<16x32xbf16, #tpu.memory_space<vmem>>, vector<16x32xbf16>,
    return
  }
  func.func @transform_0(%arg0: i32) -> (i32, i32) {
    %c0_i32 = arith.constant 0 : i32
    %c0_i32_0 = arith.constant 0 : i32
    return %arg0, %c0_i32 : i32, i32
  }
  func.func @transform_1(%arg0: i32) -> (i32, i32) {
    %c0_i32 = arith.constant 0 : i32
    %c0_i32_0 = arith.constant 0 : i32
    return %arg0, %c0_i32 : i32, i32
  }
  func.func @transform_2(%arg0: i32) -> (i32, i32) {
    %c0_i32 = arith.constant 0 : i32
    %c0_i32_0 = arith.constant 0 : i32
    return %arg0, %c0_i32 : i32, i32
  }
  func.func @transform_3(%arg0: i32) -> (i32, i32) {
    %c0_i32 = arith.constant 0 : i32
    %c0_i32_0 = arith.constant 0 : i32
    %c0_i32_1 = arith.constant 0 : i32
    return %c0_i32, %c0_i32_0 : i32, i32
  }
  func.func @transform_4(%arg0: i32) -> (i32, i32) {
    %c0_i32 = arith.constant 0 : i32
    %c0_i32_0 = arith.constant 0 : i32
    %c0_i32_1 = arith.constant 0 : i32
    return %c0_i32, %c0_i32_0 : i32, i32
  }
  func.func @transform_5(%arg0: i32) -> (i32, i32) {
    %c0_i32 = arith.constant 0 : i32
    %c0_i32_0 = arith.constant 0 : i32
    return %arg0, %c0_i32 : i32, i32
  }
  func.func @transform_6(%arg0: i32) -> (i32, i32) {
    %c0_i32 = arith.constant 0 : i32
    %c0_i32_0 = arith.constant 0 : i32
    return %arg0, %c0_i32 : i32, i32
  }
  func.func @transform_7(%arg0: i32) -> (i32, i32) {
    %c0_i32 = arith.constant 0 : i32
    %c0_i32_0 = arith.constant 0 : i32
    return %arg0, %c0_i32 : i32, i32
  }
}

</mosaic_0001>

<llo_original>
// kernel: tpu_custom_call.1
$region0: #{tpu_custom_call.1}
  #allocation0 [shape = 'u32[]', space=smem, size = 0x4, offset = 0x4, fixed_abs, tag = 'smem constant byte address 0x4 - core index']
  #allocation1 [shape = 'u32[144,128]{1,0:T(1,128)}', space=vmem, size = 0x12000, scoped, tag = 'internal scratch']
  %s0 = inlined_call_operand.hbm [shape: f32[16,32], index: 0, kind: input, shape index: {}]
  %s1 = inlined_call_operand.hbm [shape: f32[16,32], index: 1, kind: input, shape index: {}]
  %s2 = inlined_call_operand.hbm [shape: f32[16,32], index: 2, kind: input, shape index: {}]
  %s3 = inlined_call_operand.hbm [shape: bf16[32,96], index: 3, kind: input, shape index: {}]
  %s4 = inlined_call_operand.vmem [shape: f32[1,96], index: 4, kind: input, shape index: {}]
  %s5 = inlined_call_operand.hbm [shape: bf16[16,32], index: 5, kind: output, shape index: {0}]
  %s6 = inlined_call_operand.hbm [shape: bf16[16,32], index: 6, kind: output, shape index: {1}]
  %s7 = inlined_call_operand.hbm [shape: bf16[16,32], index: 7, kind: output, shape index: {2}]
  %8 = xla_tuple %s5, %s6, %s7
  %s9 = sld [smem:[#allocation0]]
  $region62: #{tpu_custom_call.1} parent=0
    _
  %s11 = ssub.s32 1, %s9
  %s12 = scalar_select 0, %s11, %s9
  $region1: #{tpu_custom_call.1} parent=0
    #allocation2 [shape = 'u8[8192]{0}', space=vmem, size = 0x2000, scoped, tag = 'input window, operand 0, single buffered']
    #allocation3 [shape = 's32[1]{0}', space=sflag, size = 0x4, scoped, tag = 'scoped memory for tpu_custom_call.1']
    #allocation4 [shape = 's32[1]{0}', space=sflag, size = 0x4, scoped, tag = 'scoped memory for tpu_custom_call.1']
    #allocation5 [shape = 'u8[8192]{0}', space=vmem, size = 0x2000, scoped, tag = 'input window, operand 1, single buffered']
    #allocation6 [shape = 's32[1]{0}', space=sflag, size = 0x4, scoped, tag = 'scoped memory for tpu_custom_call.1']
    #allocation7 [shape = 'u8[8192]{0}', space=vmem, size = 0x2000, scoped, tag = 'input window, operand 2, single buffered']
    #allocation8 [shape = 'u8[8192]{0}', space=vmem, size = 0x2000, scoped, tag = 'input window, operand 3, single buffered']
    #allocation9 [shape = 's32[1]{0}', space=sflag, size = 0x4, scoped, tag = 'scoped memory for tpu_custom_call.1']
    #allocation10 [shape = 'u8[4096]{0}', space=vmem, size = 0x1000, scoped, tag = 'output window, operand 0, single buffered']
    #allocation11 [shape = 'u8[4096]{0}', space=vmem, size = 0x1000, scoped, tag = 'output window, operand 1, single buffered']
    #allocation12 [shape = 's32[1]{0}', space=sflag, size = 0x4, scoped, tag = 'scoped memory for tpu_custom_call.1']
    #allocation13 [shape = 'u8[4096]{0}', space=vmem, size = 0x1000, scoped, tag = 'output window, operand 2, single buffered']
    %13 = vsyncpa [#allocation3], 0
    %14 = vsyncpa [#allocation6], 0
    %15 = vsyncpa [#allocation9], 0
    %16 = vsyncpa [#allocation4], 0
    %17 = vsyncpa [#allocation12], 0
    // Predicated region
    $region2: #{tpu_custom_call.1} parent=1 // pred_check
      _
    $region3: #{tpu_custom_call.1} parent=1 // pred_check_branch
      %19 = sbr.rel (0) target = $region5
    $region4: #{tpu_custom_call.1} parent=1 // pred_region
      %s21 = ssub.s32 256, 256
      %22 = vsyncadd [#allocation3], %s21
      %s23 = sshll.u32 [#allocation2], 4
      %s24 = int_to_ptr.vmem [resolvable:$true] %s23
      %29 = dma.hbm_to_vmem [thread:$0]  %s0, 256, %s24, [#allocation3], 128, 128, 8
    $region5: #{tpu_custom_call.1} parent=1 // pred_fallthru
      _
    // Predicated region
    $region6: #{tpu_custom_call.1} parent=1 // pred_check
      _
    $region7: #{tpu_custom_call.1} parent=1 // pred_check_branch
      %31 = sbr.rel (0) target = $region9
    $region8: #{tpu_custom_call.1} parent=1 // pred_region
      %s33 = ssub.s32 256, 256
      %34 = vsyncadd [#allocation6], %s33
      %s35 = sshll.u32 [#allocation5], 4
      %s36 = int_to_ptr.vmem [resolvable:$true] %s35
      %41 = dma.hbm_to_vmem [thread:$0]  %s1, 256, %s36, [#allocation6], 128, 128, 8
    $region9: #{tpu_custom_call.1} parent=1 // pred_fallthru
      _
    // Predicated region
    $region10: #{tpu_custom_call.1} parent=1 // pred_check
      _
    $region11: #{tpu_custom_call.1} parent=1 // pred_check_branch
      %43 = sbr.rel (0) target = $region13
    $region12: #{tpu_custom_call.1} parent=1 // pred_region
      %s45 = ssub.s32 256, 256
      %46 = vsyncadd [#allocation6], %s45
      %s47 = sshll.u32 [#allocation7], 4
      %s48 = int_to_ptr.vmem [resolvable:$true] %s47
      %53 = dma.hbm_to_vmem [thread:$0]  %s2, 256, %s48, [#allocation6], 128, 128, 8
    $region13: #{tpu_custom_call.1} parent=1 // pred_fallthru
      _
    // Predicated region
    $region14: #{tpu_custom_call.1} parent=1 // pred_check
      _
    $region15: #{tpu_custom_call.1} parent=1 // pred_check_branch
      %55 = sbr.rel (0) target = $region17
    $region16: #{tpu_custom_call.1} parent=1 // pred_region
      %s57 = ssub.s32 256, 256
      %58 = vsyncadd [#allocation9], %s57
      %s59 = sshll.u32 [#allocation8], 4
      %s60 = int_to_ptr.vmem [resolvable:$true] %s59
      %65 = dma.hbm_to_vmem [thread:$0]  %s3, 256, %s60, [#allocation9], 64, 64, 4
    $region17: #{tpu_custom_call.1} parent=1 // pred_fallthru
      _
    // Predicated region
    $region18: #{tpu_custom_call.1} parent=1 // pred_check
      _
    $region19: #{tpu_custom_call.1} parent=1 // pred_check_branch
      %67 = sbr.rel (0) target = $region21
    $region20: #{tpu_custom_call.1} parent=1 // pred_region
      _
    $region21: #{tpu_custom_call.1} parent=1 // pred_fallthru
      _
    // Predicated region
    $region22: #{tpu_custom_call.1} parent=1 // pred_check
      _
    $region23: #{tpu_custom_call.1} parent=1 // pred_check_branch
      %69 = sbr.rel (0) target = $region25
    $region24: #{tpu_custom_call.1} parent=1 // pred_region
      %70 = dma.done [#allocation3], 256
    $region25: #{tpu_custom_call.1} parent=1 // pred_fallthru
      _
    // Predicated region
    $region26: #{tpu_custom_call.1} parent=1 // pred_check
      _
    $region27: #{tpu_custom_call.1} parent=1 // pred_check_branch
      %72 = sbr.rel (0) target = $region29
    $region28: #{tpu_custom_call.1} parent=1 // pred_region
      %73 = dma.done [#allocation6], 256
    $region29: #{tpu_custom_call.1} parent=1 // pred_fallthru
      _
    // Predicated region
    $region30: #{tpu_custom_call.1} parent=1 // pred_check
      _
    $region31: #{tpu_custom_call.1} parent=1 // pred_check_branch
      %75 = sbr.rel (0) target = $region33
    $region32: #{tpu_custom_call.1} parent=1 // pred_region
      %76 = dma.done [#allocation6], 256
    $region33: #{tpu_custom_call.1} parent=1 // pred_fallthru
      _
    // Predicated region
    $region34: #{tpu_custom_call.1} parent=1 // pred_check
      _
    $region35: #{tpu_custom_call.1} parent=1 // pred_check_branch
      %78 = sbr.rel (0) target = $region37
    $region36: #{tpu_custom_call.1} parent=1 // pred_region
      %79 = dma.done [#allocation9], 256
    $region37: #{tpu_custom_call.1} parent=1 // pred_fallthru
      _
    %v81 = vld [vmem:[#allocation2] sm:$0xff]
    %v82 = vld [vmem:[#allocation2 + $0x8] sm:$0xff]
    %v83 = vpack.c.bf16 %v82, %v81
    %v84 = vld [vmem:[#allocation8] sm:$0xf]
    %v85 = vld [vmem:[#allocation8 + $0x4] sm:$0xf]
    %v86 = vld [vmem:[#allocation8 + $0x8] sm:$0xf]
    %v87 = vld [vmem:[#allocation8 + $0xc] sm:$0xf]
    %v88 = vld [vmem:[%s4] sm:$0x1]
    %v90 = vlaneseq
    %v91 = vshrl.u32 %v90, 7
    %v92 = vsub.s32 0, %v91
    %v93 = vrot.slane %v88, %v92
    %v99 = vunpack.c.l.b16 %v84
    %v100 = vunpack.c.l.b16 %v85
    %v101 = vunpack.c.l.b16 %v86
    %v102 = vunpack.c.l.b16 %v87
    %v103 = vpack.c.b16 %v100, %v99
    %v104 = vpack.c.b16 %v102, %v101
    %vm107 = vcmask 261120
    %v109 = vsel %vm107, %v83, 0
    %111 = vmatprep.subr.bf16.mxu0 0
    %112 = vmatpush1.bf16.msra.mxu0 0
    %113 = vmatprep.subr.bf16.mxu0 0
    %114 = vmatpush1.bf16.msra.mxu0 0
    %115 = vmatprep.subr.bf16.mxu0 0
    %116 = vmatpush1.bf16.msra.mxu0 0
    %117 = vmatprep.subr.bf16.mxu0 0
    %118 = vmatpush1.bf16.msra.mxu0 0
    %119 = vmatprep.subr.bf16.mxu0 0
    %120 = vmatpush1.bf16.msra.mxu0 0
    %121 = vmatprep.subr.bf16.mxu0 0
    %122 = vmatpush1.bf16.msra.mxu0 0
    %123 = vmatprep.subr.bf16.mxu0 0
    %124 = vmatpush1.bf16.msra.mxu0 %v104
    %125 = vmatprep.subr.bf16.mxu0 0
    %126 = vmatpush1.bf16.msra.mxu0 %v103
    %127 = vmatprep.subr.bf16.mxu0 0
    %128 = vmatpush2.bf16.msra.mxu0 0
    %129 = vmatprep.subr.bf16.mxu0 0
    %130 = vmatpush2.bf16.msra.mxu0 0
    %131 = vmatprep.subr.bf16.mxu0 0
    %132 = vmatpush2.bf16.msra.mxu0 0
    %133 = vmatprep.subr.bf16.mxu0 0
    %134 = vmatpush2.bf16.msra.mxu0 0
    %135 = vmatprep.subr.bf16.mxu0 0
    %136 = vmatpush2.bf16.msra.mxu0 0
    %137 = vmatprep.subr.bf16.mxu0 0
    %138 = vmatpush2.bf16.msra.mxu0 0
    %139 = vmatprep.subr.bf16.mxu0 0
    %140 = vmatpush2.bf16.msra.mxu0 0
    %141 = vmatprep.subr.bf16.mxu0 0
    %142 = vmatpush2.bf16.msra.mxu0 0
    %143 = vmatprep.mubr.bf16.mxu0 0
    %144 = vmatmul.mubr.bf16.gmra.mxu0 %v109
    %v145 = vpop.f32.mrf.mxu0
    %v146 = vadd.f32 %v93, %v145
    %v147 = vpop.f32.mrf.mxu0
    %v148 = vpop.f32.mrf.mxu0
    %v149 = vadd.f32 %v93, %v148
    %v150 = vpop.f32.mrf.mxu0
    %151 = vdwg.mxu0
    %v152 = vpack.c.bf16 %v149, %v146
    %v154 = vunpack.c.l.b16 %v152
    %v155 = vunpack.c.h.b16 %v152
    %v156 = vpack.c.b16 %v154, %v154
    %v157 = vpack.c.b16 %v155, %v155
    %vm160 = vcmask 257024
    %161 = vst.msk [vmem:[#allocation10] sm:$0xf] %vm160, %v156
    %162 = vst.msk [vmem:[#allocation10 + $0x4] sm:$0xf] %vm160, %v157
    %v163 = vld [vmem:[#allocation5] sm:$0xff]
    %v164 = vld [vmem:[#allocation5 + $0x8] sm:$0xff]
    %v165 = vpack.c.bf16 %v164, %v163
    %v166 = vld [vmem:[#allocation8] sm:$0xf]
    %v167 = vld [vmem:[#allocation8 + $0x4] sm:$0xf]
    %v168 = vld [vmem:[#allocation8 + $0x8] sm:$0xf]
    %v169 = vld [vmem:[#allocation8 + $0xc] sm:$0xf]
    %v170 = vld [vmem:[%s4] sm:$0x1]
    %v172 = vlaneseq
    %v173 = vshrl.u32 %v172, 7
    %v174 = vsub.s32 0, %v173
    %v175 = vrot.slane %v170, %v174
    %v180 = vunpack.c.l.b16 %v166
    %v181 = vunpack.c.l.b16 %v167
    %v182 = vunpack.c.l.b16 %v168
    %v183 = vunpack.c.l.b16 %v169
    %v184 = vpack.c.b16 %v181, %v180
    %v185 = vpack.c.b16 %v183, %v182
    %186 = vrot.lane.b32.xlu0 %v184, 96
    %v187 = vpop.permute.xlu0 %186
    %188 = vrot.lane.b32.xlu0 %v185, 96
    %v189 = vpop.permute.xlu0 %188
    %192 = vrot.lane.b32.xlu0 %v175, 96
    %v193 = vpop.permute.xlu0 %192
    %v196 = vsel %vm107, %v165, 0
    %198 = vmatprep.subr.bf16.mxu0 0
    %199 = vmatpush1.bf16.msra.mxu0 0
    %200 = vmatprep.subr.bf16.mxu0 0
    %201 = vmatpush1.bf16.msra.mxu0 0
    %202 = vmatprep.subr.bf16.mxu0 0
    %203 = vmatpush1.bf16.msra.mxu0 0
    %204 = vmatprep.subr.bf16.mxu0 0
    %205 = vmatpush1.bf16.msra.mxu0 0
    %206 = vmatprep.subr.bf16.mxu0 0
    %207 = vmatpush1.bf16.msra.mxu0 0
    %208 = vmatprep.subr.bf16.mxu0 0
    %209 = vmatpush1.bf16.msra.mxu0 0
    %210 = vmatprep.subr.bf16.mxu0 0
    %211 = vmatpush1.bf16.msra.mxu0 %v189
    %212 = vmatprep.subr.bf16.mxu0 0
    %213 = vmatpush1.bf16.msra.mxu0 %v187
    %214 = vmatprep.subr.bf16.mxu0 0
    %215 = vmatpush2.bf16.msra.mxu0 0
    %216 = vmatprep.subr.bf16.mxu0 0
    %217 = vmatpush2.bf16.msra.mxu0 0
    %218 = vmatprep.subr.bf16.mxu0 0
    %219 = vmatpush2.bf16.msra.mxu0 0
    %220 = vmatprep.subr.bf16.mxu0 0
    %221 = vmatpush2.bf16.msra.mxu0 0
    %222 = vmatprep.subr.bf16.mxu0 0
    %223 = vmatpush2.bf16.msra.mxu0 0
    %224 = vmatprep.subr.bf16.mxu0 0
    %225 = vmatpush2.bf16.msra.mxu0 0
    %226 = vmatprep.subr.bf16.mxu0 0
    %227 = vmatpush2.bf16.msra.mxu0 0
    %228 = vmatprep.subr.bf16.mxu0 0
    %229 = vmatpush2.bf16.msra.mxu0 0
    %230 = vmatprep.mubr.bf16.mxu0 0
    %231 = vmatmul.mubr.bf16.gmra.mxu0 %v196
    %v232 = vpop.f32.mrf.mxu0
    %v233 = vadd.f32 %v193, %v232
    %v234 = vpop.f32.mrf.mxu0
    %v235 = vpop.f32.mrf.mxu0
    %v236 = vadd.f32 %v193, %v235
    %v237 = vpop.f32.mrf.mxu0
    %238 = vdwg.mxu0
    %v239 = vpack.c.bf16 %v236, %v233
    %v241 = vunpack.c.l.b16 %v239
    %v242 = vunpack.c.h.b16 %v239
    %v243 = vpack.c.b16 %v241, %v241
    %v244 = vpack.c.b16 %v242, %v242
    %247 = vst.msk [vmem:[#allocation11] sm:$0xf] %vm160, %v243
    %248 = vst.msk [vmem:[#allocation11 + $0x4] sm:$0xf] %vm160, %v244
    %v249 = vld [vmem:[#allocation7] sm:$0xff]
    %v250 = vld [vmem:[#allocation7 + $0x8] sm:$0xff]
    %v251 = vpack.c.bf16 %v250, %v249
    %v252 = vld [vmem:[#allocation8] sm:$0xf]
    %v253 = vld [vmem:[#allocation8 + $0x4] sm:$0xf]
    %v254 = vld [vmem:[#allocation8 + $0x8] sm:$0xf]
    %v255 = vld [vmem:[#allocation8 + $0xc] sm:$0xf]
    %v256 = vld [vmem:[%s4] sm:$0x1]
    %v258 = vlaneseq
    %v259 = vshrl.u32 %v258, 7
    %v260 = vsub.s32 0, %v259
    %v261 = vrot.slane %v256, %v260
    %v266 = vunpack.c.l.b16 %v252
    %v267 = vunpack.c.l.b16 %v253
    %v268 = vunpack.c.l.b16 %v254
    %v269 = vunpack.c.l.b16 %v255
    %v270 = vpack.c.b16 %v267, %v266
    %v271 = vpack.c.b16 %v269, %v268
    %272 = vrot.lane.b32.xlu0 %v270, 64
    %v273 = vpop.permute.xlu0 %272
    %274 = vrot.lane.b32.xlu0 %v271, 64
    %v275 = vpop.permute.xlu0 %274
    %278 = vrot.lane.b32.xlu0 %v261, 64
    %v279 = vpop.permute.xlu0 %278
    %v282 = vsel %vm107, %v251, 0
    %284 = vmatprep.subr.bf16.mxu0 0
    %285 = vmatpush1.bf16.msra.mxu0 0
    %286 = vmatprep.subr.bf16.mxu0 0
    %287 = vmatpush1.bf16.msra.mxu0 0
    %288 = vmatprep.subr.bf16.mxu0 0
    %289 = vmatpush1.bf16.msra.mxu0 0
    %290 = vmatprep.subr.bf16.mxu0 0
    %291 = vmatpush1.bf16.msra.mxu0 0
    %292 = vmatprep.subr.bf16.mxu0 0
    %293 = vmatpush1.bf16.msra.mxu0 0
    %294 = vmatprep.subr.bf16.mxu0 0
    %295 = vmatpush1.bf16.msra.mxu0 0
    %296 = vmatprep.subr.bf16.mxu0 0
    %297 = vmatpush1.bf16.msra.mxu0 %v275
    %298 = vmatprep.subr.bf16.mxu0 0
    %299 = vmatpush1.bf16.msra.mxu0 %v273
    %300 = vmatprep.subr.bf16.mxu0 0
    %301 = vmatpush2.bf16.msra.mxu0 0
    %302 = vmatprep.subr.bf16.mxu0 0
    %303 = vmatpush2.bf16.msra.mxu0 0
    %304 = vmatprep.subr.bf16.mxu0 0
    %305 = vmatpush2.bf16.msra.mxu0 0
    %306 = vmatprep.subr.bf16.mxu0 0
    %307 = vmatpush2.bf16.msra.mxu0 0
    %308 = vmatprep.subr.bf16.mxu0 0
    %309 = vmatpush2.bf16.msra.mxu0 0
    %310 = vmatprep.subr.bf16.mxu0 0
    %311 = vmatpush2.bf16.msra.mxu0 0
    %312 = vmatprep.subr.bf16.mxu0 0
    %313 = vmatpush2.bf16.msra.mxu0 0
    %314 = vmatprep.subr.bf16.mxu0 0
    %315 = vmatpush2.bf16.msra.mxu0 0
    %316 = vmatprep.mubr.bf16.mxu0 0
    %317 = vmatmul.mubr.bf16.gmra.mxu0 %v282
    %v318 = vpop.f32.mrf.mxu0
    %v319 = vadd.f32 %v279, %v318
    %v320 = vpop.f32.mrf.mxu0
    %v321 = vpop.f32.mrf.mxu0
    %v322 = vadd.f32 %v279, %v321
    %v323 = vpop.f32.mrf.mxu0
    %324 = vdwg.mxu0
    %v325 = vpack.c.bf16 %v322, %v319
    %v327 = vunpack.c.l.b16 %v325
    %v328 = vunpack.c.h.b16 %v325
    %v329 = vpack.c.b16 %v327, %v327
    %v330 = vpack.c.b16 %v328, %v328
    %333 = vst.msk [vmem:[#allocation13] sm:$0xf] %vm160, %v329
    %334 = vst.msk [vmem:[#allocation13 + $0x4] sm:$0xf] %vm160, %v330
    // Predicated region
    $region38: #{tpu_custom_call.1} parent=1 // pred_check
      _
    $region39: #{tpu_custom_call.1} parent=1 // pred_check_branch
      %336 = sbr.rel (0) target = $region41
    $region40: #{tpu_custom_call.1} parent=1 // pred_region
      %s338 = ssub.s32 128, 128
      %339 = vsyncadd [#allocation4], %s338
      %s340 = sshll.u32 [#allocation10], 4
      %s341 = int_to_ptr.vmem [resolvable:$true] %s340
      %346 = dma.vmem_to_hbm [thread:$0]  %s341, 128, %s5, [#allocation4], 64, 64, 4
    $region41: #{tpu_custom_call.1} parent=1 // pred_fallthru
      _
    // Predicated region
    $region42: #{tpu_custom_call.1} parent=1 // pred_check
      _
    $region43: #{tpu_custom_call.1} parent=1 // pred_check_branch
      %348 = sbr.rel (0) target = $region45
    $region44: #{tpu_custom_call.1} parent=1 // pred_region
      %s350 = ssub.s32 128, 128
      %351 = vsyncadd [#allocation12], %s350
      %s352 = sshll.u32 [#allocation11], 4
      %s353 = int_to_ptr.vmem [resolvable:$true] %s352
      %358 = dma.vmem_to_hbm [thread:$0]  %s353, 128, %s6, [#allocation12], 64, 64, 4
    $region45: #{tpu_custom_call.1} parent=1 // pred_fallthru
      _
    // Predicated region
    $region46: #{tpu_custom_call.1} parent=1 // pred_check
      _
    $region47: #{tpu_custom_call.1} parent=1 // pred_check_branch
      %360 = sbr.rel (0) target = $region49
    $region48: #{tpu_custom_call.1} parent=1 // pred_region
      %s362 = ssub.s32 128, 128
      %363 = vsyncadd [#allocation12], %s362
      %s364 = sshll.u32 [#allocation13], 4
      %s365 = int_to_ptr.vmem [resolvable:$true] %s364
      %370 = dma.vmem_to_hbm [thread:$0]  %s365, 128, %s7, [#allocation12], 64, 64, 4
    $region49: #{tpu_custom_call.1} parent=1 // pred_fallthru
      _
    // Predicated region
    $region50: #{tpu_custom_call.1} parent=1 // pred_check
      _
    $region51: #{tpu_custom_call.1} parent=1 // pred_check_branch
      %372 = sbr.rel (0) target = $region53
    $region52: #{tpu_custom_call.1} parent=1 // pred_region
      %373 = dma.done [#allocation4], 128
    $region53: #{tpu_custom_call.1} parent=1 // pred_fallthru
      _
    // Predicated region
    $region54: #{tpu_custom_call.1} parent=1 // pred_check
      _
    $region55: #{tpu_custom_call.1} parent=1 // pred_check_branch
      %375 = sbr.rel (0) target = $region57
    $region56: #{tpu_custom_call.1} parent=1 // pred_region
      %376 = dma.done [#allocation12], 128
    $region57: #{tpu_custom_call.1} parent=1 // pred_fallthru
      _
    // Predicated region
    $region58: #{tpu_custom_call.1} parent=1 // pred_check
      _
    $region59: #{tpu_custom_call.1} parent=1 // pred_check_branch
      %378 = sbr.rel (0) target = $region61
    $region60: #{tpu_custom_call.1} parent=1 // pred_region
      %379 = dma.done [#allocation12], 128
    $region61: #{tpu_custom_call.1} parent=1 // pred_fallthru
      _
    %380 = vsyncpa [#allocation3], 1
    %381 = vsyncpa [#allocation6], 1
    %382 = vsyncpa [#allocation9], 1
    %383 = vsyncpa [#allocation4], 1
    %384 = vsyncpa [#allocation12], 1

</llo_original>
